<compile_context>
chip_gen: v7x
topology: tpu7x:2x2x1
jax: 0.10.0
libtpu: 0.0.40
codegen_flags: <defaults>
</compile_context>

<pallas_src>
import functools

import jax
import jax.numpy as jnp
from jax.experimental import pallas as pl
from jax.experimental.pallas import tpu as pltpu

MIN_NORM = 1e-15  # same clamp geoopt / hyperbolic libs use


def _expmap0_kernel(x_ref, o_ref, *, sqrt_c):
    """One row-tile: tanh(sqrt_c * ||x||) * x / (sqrt_c * ||x||), norm over last axis."""
    x = x_ref[...].astype(jnp.float32)                      # (tile_rows, D)
    # Row-wise L2 norm (XLU cross-lane reduce), clamped away from zero.
    sq = jnp.sum(x * x, axis=-1, keepdims=True)             # (tile_rows, 1)
    norm = jnp.maximum(jnp.sqrt(sq), MIN_NORM)
    scn = sqrt_c * norm
    # tanh and the approximate reciprocal both go to the EUP (free slot in a
    # mem-bound kernel); padded zero rows give gamma ~= 1 and output 0, no NaNs.
    gamma = jnp.tanh(scn) * pl.reciprocal(scn, approx=True)  # (tile_rows, 1)
    o_ref[...] = (x * gamma).astype(o_ref.dtype)


def _choose_tile_rows(n_rows, d, itemsize):
    """Largest row tile that keeps double-buffered in+out under ~24 MiB VMEM."""
    sublane = 16 if itemsize == 2 else 8          # bf16 packs 16 rows per vreg
    budget_bytes = 24 * 1024 * 1024               # live VMEM target (fits v7x 64 MiB)
    # double-buffered input + output tiles, f32-equivalent to be conservative
    per_row_bytes = 4 * d * 4
    max_rows = max(sublane, budget_bytes // per_row_bytes)
    tile = min(max_rows, 1024)
    tile = max(sublane, (tile // sublane) * sublane)
    # Keep >= 2 grid steps when the problem allows it (megacore sharding on v7x).
    if n_rows >= 2 * sublane:
        half = -(-n_rows // 2)
        half = -(-half // sublane) * sublane
        tile = min(tile, half)
    return tile


def expmap0(x, c=1.0):
    """Pallas TPU implementation of PoincareBall.expmap0 over the last axis.

    x: array of shape (..., D).  Returns array of same shape/dtype.
    """
    orig_shape = x.shape
    d = orig_shape[-1]
    x2 = x.reshape(-1, d)
    n = x2.shape[0]
    sqrt_c = float(c) ** 0.5

    tile_rows = _choose_tile_rows(n, d, x2.dtype.itemsize)
    n_pad = -(-n // tile_rows) * tile_rows
    if n_pad != n:
        # Zero rows are harmless: clamped norm -> gamma ~= 1, output stays 0.
        x2 = jnp.pad(x2, ((0, n_pad - n), (0, 0)))

    # VMEM: 2 double buffers x (in + out) tiles (+ slack for f32 temps).
    tile_bytes = tile_rows * d * x2.dtype.itemsize
    vmem_limit = int(min(64 << 20, max(32 << 20, 2 * (4 * tile_bytes) + (4 << 20))))

    kernel = functools.partial(_expmap0_kernel, sqrt_c=sqrt_c)

    out = pl.pallas_call(
        kernel,
        out_shape=jax.ShapeDtypeStruct((n_pad, d), x2.dtype),
        grid_spec=pltpu.PrefetchScalarGridSpec(
            num_scalar_prefetch=0,
            grid=(n_pad // tile_rows,),
            in_specs=[pl.BlockSpec((tile_rows, d), lambda i: (i, 0))],
            out_specs=pl.BlockSpec((tile_rows, d), lambda i: (i, 0)),
        ),
        compiler_params=pltpu.CompilerParams(
            dimension_semantics=("parallel",),
            vmem_limit_bytes=vmem_limit,
        ),
    )(x2)

    if n_pad != n:
        out = out[:n]
    return out.reshape(orig_shape)


def expmap0_reference(x, c=1.0):
    """Pure-JAX reference for correctness check."""
    sqrt_c = jnp.sqrt(jnp.asarray(c, jnp.float32))
    xf = x.astype(jnp.float32)
    norm = jnp.maximum(jnp.linalg.norm(xf, axis=-1, keepdims=True), MIN_NORM)
    return (jnp.tanh(sqrt_c * norm) * xf / (sqrt_c * norm)).astype(x.dtype)


if __name__ == "__main__":
    key = jax.random.PRNGKey(0)
    # Small shape consistent with the forward: batch of points with a hidden dim.
    N, D = 16, 32                      # e.g. batch=2 x seq=8 points, hidden=32
    x = jax.random.normal(key, (N, D), dtype=jnp.float32) * 0.5

    c = 1.0                            # deterministic "parameter": curvature

    out = expmap0(x, c)
    out = jax.block_until_ready(out)

    ref = expmap0_reference(x, c)
    assert out.shape == x.shape and out.dtype == x.dtype
    # approx=True reciprocal is accurate to ~2^-12 relative; outputs are O(1).
    assert jnp.allclose(out, ref, atol=1e-3, rtol=1e-3), "mismatch vs reference"

    print("KERNEL_OK")
</pallas_src>

<mosaic_0001>
module attributes {stable_mosaic.version = 11 : i64} {
  func.func @_expmap0_kernel(%arg0: i32, %arg1: memref<8x32xf32, #tpu.memory_space<vmem>>, %arg2: memref<8x32xf32, #tpu.memory_space<vmem>>) attributes {dimension_semantics = [#tpu.dimension_semantics<parallel>], iteration_bounds = array<i64: 2>, scalar_prefetch = 0 : i64, scratch_operands = 0 : i64, tpu.core_type = #tpu.core_type<tc>, window_params = [{transform_indices = @transform_0, window_bounds = array<i64: 8, 32>}, {transform_indices = @transform_1, window_bounds = array<i64: 8, 32>}]} {
    %c0 = arith.constant 0 : index
    %c0_0 = arith.constant 0 : index
    %0 = vector.load %arg1[%c0, %c0_0] : memref<8x32xf32, #tpu.memory_space<vmem>>, vector<8x32xf32>
    %1 = arith.mulf %0, %0 : vector<8x32xf32>
    %cst = arith.constant dense<0.000000e+00> : vector<8xf32>
    %2 = vector.multi_reduction <add>, %1, %cst [1] : vector<8x32xf32> to vector<8xf32>
    %3 = vector.shape_cast %2 : vector<8xf32> to vector<8x1xf32>
    %4 = math.sqrt %3 : vector<8x1xf32>
    %cst_1 = arith.constant 1.000000e-15 : f32
    %5 = vector.broadcast %cst_1 : f32 to vector<8x1xf32>
    %6 = arith.maximumf %4, %5 : vector<8x1xf32>
    %cst_2 = arith.constant 1.000000e+00 : f32
    %7 = vector.broadcast %cst_2 : f32 to vector<8x1xf32>
    %8 = arith.mulf %7, %6 : vector<8x1xf32>
    %9 = math.tanh %8 : vector<8x1xf32>
    %10 = tpu.reciprocal %8 {approx = true} : vector<8x1xf32> -> vector<8x1xf32>
    %11 = arith.mulf %9, %10 : vector<8x1xf32>
    %12 = vector.broadcast %11 : vector<8x1xf32> to vector<8x32xf32>
    %13 = arith.mulf %0, %12 : vector<8x32xf32>
    %c0_3 = arith.constant 0 : index
    %c0_4 = arith.constant 0 : index
    %14 = vector.load %arg2[%c0_3, %c0_4] : memref<8x32xf32, #tpu.memory_space<vmem>>, vector<8x32xf32>
    tpu.vector_store %arg2[%c0_3, %c0_4], %13 {strides = array<i32>} : memref<8x32xf32, #tpu.memory_space<vmem>>, vector<8x32xf32>,
    return
  }
  func.func @transform_0(%arg0: i32) -> (i32, i32) {
    %c0_i32 = arith.constant 0 : i32
    %c0_i32_0 = arith.constant 0 : i32
    return %arg0, %c0_i32 : i32, i32
  }
  func.func @transform_1(%arg0: i32) -> (i32, i32) {
    %c0_i32 = arith.constant 0 : i32
    %c0_i32_0 = arith.constant 0 : i32
    return %arg0, %c0_i32 : i32, i32
  }
}

</mosaic_0001>

<llo_original>
// kernel: tpu_custom_call.1
$region0: #{tpu_custom_call.1}
  #allocation0 [shape = 'u32[]', space=smem, size = 0x4, offset = 0x4, fixed_abs, tag = 'smem constant byte address 0x4 - core index']
  #allocation1 [shape = 'u32[144,128]{1,0:T(1,128)}', space=vmem, size = 0x12000, scoped, tag = 'internal scratch']
  %s0 = inlined_call_operand.hbm [shape: f32[16,32], index: 0, kind: input, shape index: {}]
  %s1 = inlined_call_operand.hbm [shape: f32[16,32], index: 1, kind: output, shape index: {}]
  %s2 = sld [smem:[#allocation0]]
  $region41: #{tpu_custom_call.1} parent=0
    _
  %s4 = ssub.s32 1, %s2
  %s5 = scalar_select 0, %s4, %s2
  $region1: #{tpu_custom_call.1} parent=0
    #allocation2 [shape = 'u8[8192]{0}', space=vmem, size = 0x2000, scoped, tag = 'input window, operand 0']
    #allocation3 [shape = 's32[2]{0}', space=sflag, size = 0x8, scoped, tag = 'scoped memory for tpu_custom_call.1']
    #allocation4 [shape = 's32[2]{0}', space=sflag, size = 0x8, scoped, tag = 'scoped memory for tpu_custom_call.1']
    #allocation5 [shape = 'u8[8192]{0}', space=vmem, size = 0x2000, scoped, tag = 'output window, operand 0']
    %6 = vsyncpa [#allocation3], 0
    %s7 = scalar_lea.sflag [#allocation3], 1
    %8 = vsyncpa %s7, 0
    %9 = vsyncpa [#allocation4], 0
    %s10 = scalar_lea.sflag [#allocation4], 1
    %11 = vsyncpa %s10, 0
    loop: start=0, step=1, limit=4
    $region2: #{tpu_custom_call.1} parent=1 // loop_pre_header
      _
    $region3: #{tpu_custom_call.1} parent=1 // loop_header
      %s13 = sphi 0, %s17
      %p14 = scmp.ge.s32.totalorder %s13, 4
      %s23 = sphi 0, %s25
      %s26 = sphi 0, %s23
      %s27 = sphi 0, %s26
      %s43 = sphi 0, %s27
      %s49 = sphi 0, %s51
      %s52 = sphi 0, %s49
      %s53 = sphi 0, %s52
      %s69 = sphi 0, %s53
    $region4: #{tpu_custom_call.1} parent=1 // loop_header_branch
      %16 = sbr.rel (%p14) target = $region8
    $region5: #{tpu_custom_call.1} parent=1 // loop_body
      %s18 = ssub.s32 %s13, 1
      %s19 = ssub.s32 %s13, 2
      %s20 = sadd.s32 %s13, 1
      %s21 = ssub.s32 %s13, %s20
      %p22 = scmp.eq.s32.totalorder %s21, 0
      %s24 = sadd.s32 %s23, 1
      %s25 = scalar_select %p22, %s23, %s24
      %p28 = pneg %p22
      %p29 = scmp.eq.s32.totalorder %s13, 1
      %p30 = por %p28, %p29
      %p31 = scmp.ne.s32.totalorder %s23, %s26
      %p32 = scmp.eq.s32.totalorder %s13, 0
      %p33 = por %p31, %p32
      %p34 = scmp.ne.s32.totalorder %s23, %s26
      %p35 = scmp.eq.s32.totalorder %s18, 1
      %p36 = por %p34, %p35
      %p37 = scmp.ne.s32.totalorder %s26, %s27
      %p38 = scmp.eq.s32.totalorder %s18, 0
      %p39 = por %p37, %p38
      %p40 = scmp.ne.s32.totalorder %s26, %s27
      %p41 = scmp.eq.s32.totalorder %s19, 1
      %p42 = por %p40, %p41
      %p44 = scmp.ne.s32.totalorder %s27, %s43
      %p45 = scmp.eq.s32.totalorder %s19, 0
      %p46 = por %p44, %p45
      %s47 = ssub.s32 %s13, %s20
      %p48 = scmp.eq.s32.totalorder %s47, 0
      %s50 = sadd.s32 %s49, 1
      %s51 = scalar_select %p48, %s49, %s50
      %p54 = pneg %p48
      %p55 = scmp.eq.s32.totalorder %s13, 1
      %p56 = por %p54, %p55
      %p57 = scmp.ne.s32.totalorder %s49, %s52
      %p58 = scmp.eq.s32.totalorder %s13, 0
      %p59 = por %p57, %p58
      %p60 = scmp.ne.s32.totalorder %s49, %s52
      %p61 = scmp.eq.s32.totalorder %s18, 1
      %p62 = por %p60, %p61
      %p63 = scmp.ne.s32.totalorder %s52, %s53
      %p64 = scmp.eq.s32.totalorder %s18, 0
      %p65 = por %p63, %p64
      %p66 = scmp.ne.s32.totalorder %s52, %s53
      %p67 = scmp.eq.s32.totalorder %s19, 1
      %p68 = por %p66, %p67
      %p70 = scmp.ne.s32.totalorder %s53, %s69
      %p71 = scmp.eq.s32.totalorder %s19, 0
      %p72 = por %p70, %p71
      %p73 = scmp.le.s32.totalorder 1, %s13
      %p74 = scmp.lt.s32.totalorder %s13, 3
      %p75 = pnand %p73, %p74
      %p76 = pneg %p75
      // Predicated region
      $region9: #{tpu_custom_call.1} parent=5 // pred_check
        _
      $region10: #{tpu_custom_call.1} parent=5 // pred_check_branch
        %78 = sbr.rel (%p75) target = $region12
      $region11: #{tpu_custom_call.1} parent=5 // pred_region
        %s79 = ssub.s32 %s13, 1
      $region12: #{tpu_custom_call.1} parent=5 // pred_fallthru
        _
      %p80 = scmp.lt.s32.totalorder %s13, 2
      // Predicated region
      $region13: #{tpu_custom_call.1} parent=5 // pred_check
        %p81 = pneg %p80
      $region14: #{tpu_custom_call.1} parent=5 // pred_check_branch
        %83 = sbr.rel (%p81) target = $region16
      $region15: #{tpu_custom_call.1} parent=5 // pred_region
        // Predicated region
        $region17: #{tpu_custom_call.1} parent=15 // pred_check
          %p84 = pneg %p33
        $region18: #{tpu_custom_call.1} parent=15 // pred_check_branch
          %86 = sbr.rel (%p84) target = $region20
        $region19: #{tpu_custom_call.1} parent=15 // pred_region
          %s87 = sand.u32 %s23, 1
          %s88 = scalar_lea.sflag [#allocation3], %s87
          %s89 = sand.u32 %s23, 1
          %s90 = smul.addr %s89, 8
          %s91 = scalar_lea.vmem [#allocation2], %s90
          %s93 = ssub.s32 128, 128
          %94 = vsyncadd %s88, %s93
          %s95 = smul.addr %s13, 128
          %s96 = scalar_lea.hbm %s0, %s95
          %s98 = sshll.u32 %s91, 4
          %s99 = int_to_ptr.vmem [resolvable:$true] %s98
          %101 = dma.hbm_to_vmem [thread:$0]  %s96, 128, %s99, %s88
        $region20: #{tpu_custom_call.1} parent=15 // pred_fallthru
          _
      $region16: #{tpu_custom_call.1} parent=5 // pred_fallthru
        _
      %p102 = scmp.le.s32.totalorder 1, %s13
      %p103 = scmp.lt.s32.totalorder %s13, 3
      %p104 = pnand %p102, %p103
      %p105 = pneg %p104
      // Predicated region
      $region21: #{tpu_custom_call.1} parent=5 // pred_check
        _
      $region22: #{tpu_custom_call.1} parent=5 // pred_check_branch
        %107 = sbr.rel (%p104) target = $region24
      $region23: #{tpu_custom_call.1} parent=5 // pred_region
        %s108 = ssub.s32 %s13, 1
        %s109 = sand.u32 %s26, 1
        %s110 = scalar_lea.sflag [#allocation3], %s109
        %s111 = sand.u32 %s26, 1
        %s112 = smul.addr %s111, 8
        %s113 = scalar_lea.vmem [#allocation2], %s112
        // Predicated region
        $region25: #{tpu_custom_call.1} parent=23 // pred_check
          %p114 = pneg %p39
        $region26: #{tpu_custom_call.1} parent=23 // pred_check_branch
          %116 = sbr.rel (%p114) target = $region28
        $region27: #{tpu_custom_call.1} parent=23 // pred_region
          %117 = dma.done %s110, 128
        $region28: #{tpu_custom_call.1} parent=23 // pred_fallthru
          _
        %s118 = sand.u32 %s26, 1
        %s119 = scalar_lea.sflag [#allocation3], %s118
        %s120 = sand.u32 %s26, 1
        %s121 = smul.addr %s120, 8
        %s122 = scalar_lea.vmem [#allocation2], %s121
        %p123 = pneg %p39
        %p124 = pneg %p36
        %p125 = pneg %p65
        %p126 = pneg %p62
        %s127 = sand.u32 %s52, 1
        %s128 = scalar_lea.sflag [#allocation4], %s127
        %s129 = sand.u32 %s52, 1
        %s130 = smul.addr %s129, 8
        %s131 = scalar_lea.vmem [#allocation5], %s130
        %v132 = vld [vmem:[%s113] sm:$0xff]
        %v133 = vmul.f32 %v132, %v132
        %vm134 = vcmask 261120
        %v135 = vsel %vm134, %v133, 0.0
        %136 = vadd.xlane.f32.xlu0 %v135
        %v137 = vpop.xlane.xlu0 %136
        %v138 = vrsqrt.pop %v137
        %v139 = vmul.f32 %v137, %v138
        %vm140 = vcmp.eq.f32.partialorder %v137, inf
        %v141 = vsel %vm140, %v137, %v139
        %vm142 = vcmp.eq.f32.partialorder %v137, 0.0
        %v143 = vand.u32 %v137, 2147483648
        %v144 = vsel %vm142, %v143, %v141
        %v145 = vmax.f32 %v144, 1e-15
        %v146 = vtanh.pop %v145
        %v147 = vrcp.pop %v145
        %v148 = vmul.f32 %v146, %v147
        %v149 = vmul.f32 %v132, %v148
        %150 = vst.msk [vmem:[%s131] sm:$0xff] %vm134, %v149
        %s151 = sand.u32 %s52, 1
        %s152 = scalar_lea.sflag [#allocation4], %s151
        %s153 = sand.u32 %s52, 1
        %s154 = smul.addr %s153, 8
        %s155 = scalar_lea.vmem [#allocation5], %s154
        // Predicated region
        $region29: #{tpu_custom_call.1} parent=23 // pred_check
          %p156 = pneg %p62
        $region30: #{tpu_custom_call.1} parent=23 // pred_check_branch
          %158 = sbr.rel (%p156) target = $region32
        $region31: #{tpu_custom_call.1} parent=23 // pred_region
          %s160 = ssub.s32 128, 128
          %161 = vsyncadd %s152, %s160
          %s162 = smul.addr %s18, 128
          %s163 = scalar_lea.hbm %s1, %s162
          %s165 = sshll.u32 %s155, 4
          %s166 = int_to_ptr.vmem [resolvable:$true] %s165
          %168 = dma.vmem_to_hbm [thread:$0]  %s166, 128, %s163, %s152
        $region32: #{tpu_custom_call.1} parent=23 // pred_fallthru
          _
      $region24: #{tpu_custom_call.1} parent=5 // pred_fallthru
        _
      %p169 = scmp.le.s32.totalorder 2, %s13
      // Predicated region
      $region33: #{tpu_custom_call.1} parent=5 // pred_check
        %p170 = pneg %p169
      $region34: #{tpu_custom_call.1} parent=5 // pred_check_branch
        %172 = sbr.rel (%p170) target = $region36
      $region35: #{tpu_custom_call.1} parent=5 // pred_region
        %s173 = ssub.s32 %s13, 2
        // Predicated region
        $region37: #{tpu_custom_call.1} parent=35 // pred_check
          %p174 = pneg %p68
        $region38: #{tpu_custom_call.1} parent=35 // pred_check_branch
          %176 = sbr.rel (%p174) target = $region40
        $region39: #{tpu_custom_call.1} parent=35 // pred_region
          %s177 = sand.u32 %s53, 1
          %s178 = scalar_lea.sflag [#allocation4], %s177
          %s179 = sand.u32 %s53, 1
          %s180 = smul.addr %s179, 8
          %s181 = scalar_lea.vmem [#allocation5], %s180
          %182 = dma.done %s178, 128
        $region40: #{tpu_custom_call.1} parent=35 // pred_fallthru
          _
      $region36: #{tpu_custom_call.1} parent=5 // pred_fallthru
        _
    $region6: #{tpu_custom_call.1} parent=1 // loop_footer
      %s17 = sadd.s32 1, %s13
    $region7: #{tpu_custom_call.1} parent=1 // loop_footer_branch
      %12 = sbr.rel target = $region3
    $region8: #{tpu_custom_call.1} parent=1 // loop_exit
      _
    %183 = vsyncpa [#allocation3], 1
    %s184 = scalar_lea.sflag [#allocation3], 1
    %185 = vsyncpa %s184, 1
    %186 = vsyncpa [#allocation4], 1
    %s187 = scalar_lea.sflag [#allocation4], 1
    %188 = vsyncpa %s187, 1

</llo_original>
